<compile_context>
chip_gen: v6e
topology: v6e:2x2x1
jax: 0.10.0
libtpu: 0.0.40
codegen_flags: <defaults>
</compile_context>

<pallas_src>
import math

import jax
import jax.numpy as jnp
import numpy as np
from jax.experimental import pallas as pl
from jax.experimental.pallas import tpu as pltpu


# ----------------------------- Pallas kernel ---------------------------------

def _rmsnorm_kernel(x_ref, g_ref, o_ref):
    # x_ref: (Bt, C, TL) native dtype; g_ref: (1, C, 1) f32 with sqrt(C) folded in.
    x = x_ref[...].astype(jnp.float32)                     # compute in f32
    ss = jnp.sum(x * x, axis=1, keepdims=True)             # (Bt, 1, TL) sublane reduce
    # F.normalize eps: x / max(||x||_2, 1e-12) == x * rsqrt(max(ss, 1e-24))
    inv = jax.lax.rsqrt(jnp.maximum(ss, 1e-24))            # EUP, not VALU divide
    o_ref[...] = (x * inv * g_ref[...]).astype(o_ref.dtype)


# --------------------------- block-size selection -----------------------------

def _choose_tiles(B, C, L_pad, itemsize, target_bytes=2 << 20):
    """Pick (Bt, tile_l) so each block is ~target_bytes, lane-dense, and the
    grid keeps >=2 steps (for megacore) whenever the problem is big enough."""
    n_chunks = L_pad // 128

    # tile_l: largest 128-multiple dividing L_pad with C*tile_l*itemsize <= target.
    tile_l = 128
    for d in range(1, n_chunks + 1):
        if n_chunks % d == 0:
            tl = d * 128
            fits = C * tl * itemsize <= target_bytes
            steps = (n_chunks // d) * B
            if fits and (steps >= 2 or n_chunks * B < 2):
                tile_l = tl
    grid_l = L_pad // tile_l

    # Bt: grow batch blocking while the block stays under target and >=2 steps remain.
    bt = 1
    for d in range(1, B + 1):
        if B % d == 0:
            blk = d * C * tile_l * itemsize
            steps = (B // d) * grid_l
            if blk <= target_bytes and (steps >= 2 or B * grid_l < 2):
                bt = d
    return bt, tile_l


# ------------------------------ wrapper --------------------------------------

def rmsnorm_forward(x_ncl, g):
    """x_ncl: (B, C, L) like PyTorch NCW (any float dtype); g: (1, C, 1) gain."""
    B, C, L = x_ncl.shape
    dtype = x_ncl.dtype
    itemsize = jnp.dtype(dtype).itemsize

    # Pad L up to a multiple of 128 (lane-dense, unmasked stores); sliced off below.
    L_pad = ((L + 127) // 128) * 128
    x = x_ncl
    if L_pad != L:
        x = jnp.pad(x_ncl, ((0, 0), (0, 0), (0, L_pad - L)))

    bt, tile_l = _choose_tiles(B, C, L_pad, itemsize)
    grid = (B // bt, L_pad // tile_l)

    # Fold sqrt(C) into the gain once; kernel only multiplies.
    g2 = (jnp.reshape(g, (1, C, 1)) * math.sqrt(C)).astype(jnp.float32)

    # VMEM budget: double-buffered in + out blocks (native dtype) plus the f32
    # compute intermediates, with headroom.  Always < 64 MiB (v7x-safe).
    blk_native = bt * C * tile_l * itemsize
    blk_f32 = bt * C * tile_l * 4
    vmem_limit = int(min(4 * blk_native + 4 * blk_f32 + (2 << 20), 60 * 1024 * 1024))
    vmem_limit = max(vmem_limit, 16 * 1024 * 1024)

    cost = pl.CostEstimate(
        flops=3 * B * C * L_pad,
        transcendentals=B * L_pad,
        bytes_accessed=2 * B * C * L_pad * itemsize + C * 4,
    )

    out = pl.pallas_call(
        _rmsnorm_kernel,
        out_shape=jax.ShapeDtypeStruct((B, C, L_pad), dtype),
        grid=grid,
        in_specs=[
            pl.BlockSpec((bt, C, tile_l), lambda b, l: (b, 0, l)),  # x tile
            pl.BlockSpec((1, C, 1), lambda b, l: (0, 0, 0)),        # gain (resident)
        ],
        out_specs=pl.BlockSpec((bt, C, tile_l), lambda b, l: (b, 0, l)),
        compiler_params=pltpu.CompilerParams(
            dimension_semantics=("parallel", "parallel"),
            vmem_limit_bytes=vmem_limit,
        ),
        cost_estimate=cost,
    )(x, g2)

    if L_pad != L:
        out = out[:, :, :L]
    return out


# --------------------------- pure-JAX reference -------------------------------

def rmsnorm_reference(x_ncl, g):
    x = x_ncl.astype(jnp.float32)
    C = x.shape[1]
    norm = jnp.sqrt(jnp.sum(x * x, axis=1, keepdims=True))          # (B, 1, L)
    return x / jnp.maximum(norm, 1e-12) * g.astype(jnp.float32) * (C ** 0.5)


# --------------------------------- main ---------------------------------------

if __name__ == "__main__":
    key = jax.random.PRNGKey(0)
    kx, kg, kx2 = jax.random.split(key, 3)

    # Case 1: f32, L a multiple of 128.
    B, C, L = 2, 32, 256
    x = jax.random.normal(kx, (B, C, L), dtype=jnp.float32)          # PyTorch NCW layout
    g = 1.0 + 0.1 * jax.random.normal(kg, (1, C, 1), dtype=jnp.float32)

    out = rmsnorm_forward(x, g)
    out = jax.block_until_ready(out)
    ref = rmsnorm_reference(x, g)
    np.testing.assert_allclose(np.asarray(out), np.asarray(ref), rtol=1e-5, atol=1e-5)
    assert out.shape == (B, C, L) and out.dtype == x.dtype

    # Case 2: bf16 I/O on the wire (native-dtype path), odd L exercising padding.
    B2, C2, L2 = 2, 32, 200
    x2 = jax.random.normal(kx2, (B2, C2, L2), dtype=jnp.float32).astype(jnp.bfloat16)
    out2 = jax.block_until_ready(rmsnorm_forward(x2, g))
    ref2 = rmsnorm_reference(x2, g)
    assert out2.shape == (B2, C2, L2) and out2.dtype == jnp.bfloat16
    np.testing.assert_allclose(np.asarray(out2, dtype=np.float32),
                               np.asarray(ref2), rtol=5e-2, atol=1e-1)

    print("KERNEL_OK")
</pallas_src>

<mosaic_0001>
module attributes {stable_mosaic.version = 11 : i64} {
  func.func @_rmsnorm_kernel(%arg0: i32, %arg1: i32, %arg2: memref<1x32x256xf32, #tpu.memory_space<vmem>>, %arg3: memref<1x32x1xf32, #tpu.memory_space<vmem>>, %arg4: memref<1x32x256xf32, #tpu.memory_space<vmem>>) attributes {dimension_semantics = [#tpu.dimension_semantics<parallel>, #tpu.dimension_semantics<parallel>], iteration_bounds = array<i64: 2, 1>, scalar_prefetch = 0 : i64, scratch_operands = 0 : i64, tpu.core_type = #tpu.core_type<tc>, window_params = [{transform_indices = @transform_0, window_bounds = array<i64: 1, 32, 256>}, {pipeline_mode = #tpu.pipeline_mode<synchronous>, transform_indices = @transform_1, window_bounds = array<i64: 1, 32, 1>}, {transform_indices = @transform_2, window_bounds = array<i64: 1, 32, 256>}]} {
    %c0 = arith.constant 0 : index
    %c0_0 = arith.constant 0 : index
    %c0_1 = arith.constant 0 : index
    %0 = vector.load %arg2[%c0, %c0_0, %c0_1] : memref<1x32x256xf32, #tpu.memory_space<vmem>>, vector<1x32x256xf32>
    %1 = arith.mulf %0, %0 : vector<1x32x256xf32>
    %cst = arith.constant dense<0.000000e+00> : vector<1x256xf32>
    %2 = vector.multi_reduction <add>, %1, %cst [1] : vector<1x32x256xf32> to vector<1x256xf32>
    %3 = vector.shape_cast %2 : vector<1x256xf32> to vector<1x1x256xf32>
    %cst_2 = arith.constant 1.000000e-24 : f32
    %4 = vector.broadcast %cst_2 : f32 to vector<1x1x256xf32>
    %5 = arith.maximumf %3, %4 : vector<1x1x256xf32>
    %6 = math.rsqrt %5 : vector<1x1x256xf32>
    %7 = vector.broadcast %6 : vector<1x1x256xf32> to vector<1x32x256xf32>
    %8 = arith.mulf %0, %7 : vector<1x32x256xf32>
    %c0_3 = arith.constant 0 : index
    %c0_4 = arith.constant 0 : index
    %c0_5 = arith.constant 0 : index
    %9 = vector.load %arg3[%c0_3, %c0_4, %c0_5] : memref<1x32x1xf32, #tpu.memory_space<vmem>>, vector<1x32x1xf32>
    %10 = vector.broadcast %9 : vector<1x32x1xf32> to vector<1x32x256xf32>
    %11 = arith.mulf %8, %10 : vector<1x32x256xf32>
    %c0_6 = arith.constant 0 : index
    %c0_7 = arith.constant 0 : index
    %c0_8 = arith.constant 0 : index
    %12 = vector.load %arg4[%c0_6, %c0_7, %c0_8] : memref<1x32x256xf32, #tpu.memory_space<vmem>>, vector<1x32x256xf32>
    tpu.vector_store %arg4[%c0_6, %c0_7, %c0_8], %11 {strides = array<i32>} : memref<1x32x256xf32, #tpu.memory_space<vmem>>, vector<1x32x256xf32>,
    return
  }
  func.func @transform_0(%arg0: i32, %arg1: i32) -> (i32, i32, i32) {
    %c0_i32 = arith.constant 0 : i32
    %c0_i32_0 = arith.constant 0 : i32
    return %arg0, %c0_i32, %arg1 : i32, i32, i32
  }
  func.func @transform_1(%arg0: i32, %arg1: i32) -> (i32, i32, i32) {
    %c0_i32 = arith.constant 0 : i32
    %c0_i32_0 = arith.constant 0 : i32
    %c0_i32_1 = arith.constant 0 : i32
    %c0_i32_2 = arith.constant 0 : i32
    return %c0_i32, %c0_i32_0, %c0_i32_1 : i32, i32, i32
  }
  func.func @transform_2(%arg0: i32, %arg1: i32) -> (i32, i32, i32) {
    %c0_i32 = arith.constant 0 : i32
    %c0_i32_0 = arith.constant 0 : i32
    return %arg0, %c0_i32, %arg1 : i32, i32, i32
  }
}

</mosaic_0001>

<llo_original>
// kernel: tpu_custom_call.1
$region0: #{tpu_custom_call.1}
  #allocation0 [shape = 'u32[]', space=smem, size = 0x4, offset = 0x4, fixed_abs, tag = 'smem constant byte address 0x4 - core index']
  #allocation1 [shape = 'u32[144,128]{1,0:T(1,128)}', space=vmem, size = 0x12000, scoped, tag = 'internal scratch']
  %s0 = inlined_call_operand.hbm [shape: f32[2,32,256], index: 0, kind: input, shape index: {}]
  %s1 = inlined_call_operand.vmem [shape: f32[1,32,1], index: 1, kind: input, shape index: {}]
  %s2 = inlined_call_operand.hbm [shape: f32[2,32,256], index: 2, kind: output, shape index: {}]
  %s3 = sld [smem:[#allocation0]]
  $region45: #{tpu_custom_call.1} parent=0
    _
  %s5 = ssub.s32 1, %s3
  %s6 = scalar_select 0, %s5, %s3
  $region1: #{tpu_custom_call.1} parent=0
    #allocation2 [shape = 'u8[65536]{0}', space=vmem, size = 0x10000, scoped, tag = 'input window, operand 0']
    #allocation3 [shape = 's32[2]{0}', space=sflag, size = 0x8, scoped, tag = 'scoped memory for tpu_custom_call.1']
    #allocation4 [shape = 's32[2]{0}', space=sflag, size = 0x8, scoped, tag = 'scoped memory for tpu_custom_call.1']
    #allocation5 [shape = 'u8[65536]{0}', space=vmem, size = 0x10000, scoped, tag = 'output window, operand 0']
    %7 = vsyncpa [#allocation3], 0
    %s8 = scalar_lea.sflag [#allocation3], 1
    %9 = vsyncpa %s8, 0
    %10 = vsyncpa [#allocation4], 0
    %s11 = scalar_lea.sflag [#allocation4], 1
    %12 = vsyncpa %s11, 0
    loop: start=0, step=1, limit=4
    $region2: #{tpu_custom_call.1} parent=1 // loop_pre_header
      _
    $region3: #{tpu_custom_call.1} parent=1 // loop_header
      %s14 = sphi 0, %s18
      %p15 = scmp.ge.s32.totalorder %s14, 4
      %s21 = sphi 0, %s33
      %s22 = sphi 0, %s29
      %s23 = sphi 0, %s21
      %s24 = sphi 0, %s22
      %s25 = sphi 0, %s23
      %s26 = sphi 0, %s24
      %s38 = sphi 0, %s40
      %s41 = sphi 0, %s38
      %s42 = sphi 0, %s41
      %s58 = sphi 0, %s42
      %s62 = sphi 0, %s62
      %s64 = sphi 0, %s62
      %s65 = sphi 0, %s64
      %s79 = sphi 0, %s65
      %s87 = sphi 0, %s89
      %s90 = sphi 0, %s87
      %s91 = sphi 0, %s90
      %s107 = sphi 0, %s91
    $region4: #{tpu_custom_call.1} parent=1 // loop_header_branch
      %17 = sbr.rel (%p15) target = $region8
    $region5: #{tpu_custom_call.1} parent=1 // loop_body
      %s19 = ssub.s32 %s14, 1
      %s20 = ssub.s32 %s14, 2
      %s27 = sadd.s32 1, %s22
      %p28 = scmp.ge.s32.totalorder %s27, 1
      %s29 = scalar_select %p28, 0, %s27
      %s30 = sadd.s32 1, %s21
      %s31 = scalar_select %p28, %s30, %s21
      %p32 = scmp.ge.s32.totalorder %s31, 2
      %s33 = scalar_select %p32, 0, %s31
      %s34 = ssub.s32 %s21, %s33
      %s35 = ssub.s32 %s22, %s29
      %s36 = sor.u32 %s34, %s35
      %p37 = scmp.eq.s32.totalorder %s36, 0
      %s39 = sadd.s32 %s38, 1
      %s40 = scalar_select %p37, %s38, %s39
      %p43 = pneg %p37
      %p44 = scmp.eq.s32.totalorder %s14, 1
      %p45 = por %p43, %p44
      %p46 = scmp.ne.s32.totalorder %s38, %s41
      %p47 = scmp.eq.s32.totalorder %s14, 0
      %p48 = por %p46, %p47
      %p49 = scmp.ne.s32.totalorder %s38, %s41
      %p50 = scmp.eq.s32.totalorder %s19, 1
      %p51 = por %p49, %p50
      %p52 = scmp.ne.s32.totalorder %s41, %s42
      %p53 = scmp.eq.s32.totalorder %s19, 0
      %p54 = por %p52, %p53
      %p55 = scmp.ne.s32.totalorder %s41, %s42
      %p56 = scmp.eq.s32.totalorder %s20, 1
      %p57 = por %p55, %p56
      %p59 = scmp.ne.s32.totalorder %s42, %s58
      %p60 = scmp.eq.s32.totalorder %s20, 0
      %p61 = por %p59, %p60
      %s63 = sadd.s32 %s62, 1
      %p66 = scmp.eq.s32.totalorder %s14, 1
      %p67 = scmp.ne.s32.totalorder %s62, %s64
      %p68 = scmp.eq.s32.totalorder %s14, 0
      %p69 = por %p67, %p68
      %p70 = scmp.ne.s32.totalorder %s62, %s64
      %p71 = scmp.eq.s32.totalorder %s19, 1
      %p72 = por %p70, %p71
      %p73 = scmp.ne.s32.totalorder %s64, %s65
      %p74 = scmp.eq.s32.totalorder %s19, 0
      %p75 = por %p73, %p74
      %p76 = scmp.ne.s32.totalorder %s64, %s65
      %p77 = scmp.eq.s32.totalorder %s20, 1
      %p78 = por %p76, %p77
      %p80 = scmp.ne.s32.totalorder %s65, %s79
      %p81 = scmp.eq.s32.totalorder %s20, 0
      %p82 = por %p80, %p81
      %s83 = ssub.s32 %s21, %s33
      %s84 = ssub.s32 %s22, %s29
      %s85 = sor.u32 %s83, %s84
      %p86 = scmp.eq.s32.totalorder %s85, 0
      %s88 = sadd.s32 %s87, 1
      %s89 = scalar_select %p86, %s87, %s88
      %p92 = pneg %p86
      %p93 = scmp.eq.s32.totalorder %s14, 1
      %p94 = por %p92, %p93
      %p95 = scmp.ne.s32.totalorder %s87, %s90
      %p96 = scmp.eq.s32.totalorder %s14, 0
      %p97 = por %p95, %p96
      %p98 = scmp.ne.s32.totalorder %s87, %s90
      %p99 = scmp.eq.s32.totalorder %s19, 1
      %p100 = por %p98, %p99
      %p101 = scmp.ne.s32.totalorder %s90, %s91
      %p102 = scmp.eq.s32.totalorder %s19, 0
      %p103 = por %p101, %p102
      %p104 = scmp.ne.s32.totalorder %s90, %s91
      %p105 = scmp.eq.s32.totalorder %s20, 1
      %p106 = por %p104, %p105
      %p108 = scmp.ne.s32.totalorder %s91, %s107
      %p109 = scmp.eq.s32.totalorder %s20, 0
      %p110 = por %p108, %p109
      %p111 = scmp.le.s32.totalorder 1, %s14
      %p112 = scmp.lt.s32.totalorder %s14, 3
      %p113 = pnand %p111, %p112
      %p114 = pneg %p113
      // Predicated region
      $region9: #{tpu_custom_call.1} parent=5 // pred_check
        _
      $region10: #{tpu_custom_call.1} parent=5 // pred_check_branch
        %116 = sbr.rel (%p113) target = $region12
      $region11: #{tpu_custom_call.1} parent=5 // pred_region
        %s117 = ssub.s32 %s14, 1
        // Predicated region
        $region13: #{tpu_custom_call.1} parent=11 // pred_check
          %p118 = pneg %p75
        $region14: #{tpu_custom_call.1} parent=11 // pred_check_branch
          %120 = sbr.rel (%p118) target = $region16
        $region15: #{tpu_custom_call.1} parent=11 // pred_region
          _
        $region16: #{tpu_custom_call.1} parent=11 // pred_fallthru
          _
      $region12: #{tpu_custom_call.1} parent=5 // pred_fallthru
        _
      %p121 = scmp.lt.s32.totalorder %s14, 2
      // Predicated region
      $region17: #{tpu_custom_call.1} parent=5 // pred_check
        %p122 = pneg %p121
      $region18: #{tpu_custom_call.1} parent=5 // pred_check_branch
        %124 = sbr.rel (%p122) target = $region20
      $region19: #{tpu_custom_call.1} parent=5 // pred_region
        // Predicated region
        $region21: #{tpu_custom_call.1} parent=19 // pred_check
          %p125 = pneg %p48
        $region22: #{tpu_custom_call.1} parent=19 // pred_check_branch
          %127 = sbr.rel (%p125) target = $region24
        $region23: #{tpu_custom_call.1} parent=19 // pred_region
          %s128 = sand.u32 %s38, 1
          %s129 = scalar_lea.sflag [#allocation3], %s128
          %s130 = sand.u32 %s38, 1
          %s131 = smul.addr %s130, 64
          %s132 = scalar_lea.vmem [#allocation2], %s131
          %s133 = smul.u32 2, %s22
          %s135 = ssub.s32 1024, 1024
          %136 = vsyncadd %s129, %s135
          %s137 = smul.addr %s21, 8
          %s138 = sadd.s32 %s133, %s137
          %s139 = smul.addr %s138, 128
          %s140 = scalar_lea.hbm %s0, %s139
          %s141 = sshll.u32 %s132, 4
          %s142 = int_to_ptr.vmem [resolvable:$true] %s141
          %147 = dma.hbm_to_vmem [thread:$0]  %s140, 1024, %s142, %s129, 256, 256, 16
        $region24: #{tpu_custom_call.1} parent=19 // pred_fallthru
          _
      $region20: #{tpu_custom_call.1} parent=5 // pred_fallthru
        _
      %p148 = scmp.le.s32.totalorder 1, %s14
      %p149 = scmp.lt.s32.totalorder %s14, 3
      %p150 = pnand %p148, %p149
      %p151 = pneg %p150
      // Predicated region
      $region25: #{tpu_custom_call.1} parent=5 // pred_check
        _
      $region26: #{tpu_custom_call.1} parent=5 // pred_check_branch
        %153 = sbr.rel (%p150) target = $region28
      $region27: #{tpu_custom_call.1} parent=5 // pred_region
        %s154 = ssub.s32 %s14, 1
        %s155 = sand.u32 %s41, 1
        %s156 = scalar_lea.sflag [#allocation3], %s155
        %s157 = sand.u32 %s41, 1
        %s158 = smul.addr %s157, 64
        %s159 = scalar_lea.vmem [#allocation2], %s158
        // Predicated region
        $region29: #{tpu_custom_call.1} parent=27 // pred_check
          %p160 = pneg %p54
        $region30: #{tpu_custom_call.1} parent=27 // pred_check_branch
          %162 = sbr.rel (%p160) target = $region32
        $region31: #{tpu_custom_call.1} parent=27 // pred_region
          %163 = dma.done %s156, 1024
        $region32: #{tpu_custom_call.1} parent=27 // pred_fallthru
          _
        %s164 = sand.u32 %s41, 1
        %s165 = scalar_lea.sflag [#allocation3], %s164
        %s166 = sand.u32 %s41, 1
        %s167 = smul.addr %s166, 64
        %s168 = scalar_lea.vmem [#allocation2], %s167
        %p169 = pneg %p54
        %p170 = pneg %p51
        %p171 = pneg %p75
        %p172 = pneg %p72
        %p173 = pneg %p103
        %p174 = pneg %p100
        %s175 = sand.u32 %s90, 1
        %s176 = scalar_lea.sflag [#allocation4], %s175
        %s177 = sand.u32 %s90, 1
        %s178 = smul.addr %s177, 64
        %s179 = scalar_lea.vmem [#allocation5], %s178
        %s180 = smul.u32 2, %s24
        %s181 = smul.u32 2, %s24
        %v182 = vld [vmem:[%s159] sm:$0xff]
        %v183 = vld [vmem:[%s159 + $0x8] sm:$0xff]
        %v184 = vld [vmem:[%s159 + $0x10] sm:$0xff]
        %v185 = vld [vmem:[%s159 + $0x18] sm:$0xff]
        %v186 = vld [vmem:[%s159 + $0x20] sm:$0xff]
        %v187 = vld [vmem:[%s159 + $0x28] sm:$0xff]
        %v188 = vld [vmem:[%s159 + $0x30] sm:$0xff]
        %v189 = vld [vmem:[%s159 + $0x38] sm:$0xff]
        %v190 = vmul.f32 %v182, %v182
        %v191 = vmul.f32 %v183, %v183
        %v192 = vmul.f32 %v184, %v184
        %v193 = vmul.f32 %v185, %v185
        %v194 = vmul.f32 %v186, %v186
        %v195 = vmul.f32 %v187, %v187
        %v196 = vmul.f32 %v188, %v188
        %v197 = vmul.f32 %v189, %v189
        %v198 = vadd.f32 %v190, %v192
        %v199 = vadd.f32 %v198, %v194
        %v200 = vadd.f32 %v199, %v196
        %v201 = vrot.slane %v200, 4
        %v202 = vadd.f32 %v200, %v201
        %v203 = vrot.slane %v202, 2
        %v204 = vadd.f32 %v202, %v203
        %v205 = vrot.slane %v204, 1
        %v206 = vadd.f32 %v204, %v205
        %v207 = vadd.f32 %v191, %v193
        %v208 = vadd.f32 %v207, %v195
        %v209 = vadd.f32 %v208, %v197
        %v210 = vrot.slane %v209, 4
        %v211 = vadd.f32 %v209, %v210
        %v212 = vrot.slane %v211, 2
        %v213 = vadd.f32 %v211, %v212
        %v214 = vrot.slane %v213, 1
        %v215 = vadd.f32 %v213, %v214
        %v216 = vmax.f32 %v206, 1e-24
        %v217 = vmax.f32 %v215, 1e-24
        %v218 = vrsqrt.pop %v216
        %v219 = vrsqrt.pop %v217
        %v220 = vmul.f32 %v182, %v218
        %v221 = vmul.f32 %v183, %v219
        %v222 = vmul.f32 %v184, %v218
        %v223 = vmul.f32 %v185, %v219
        %v224 = vmul.f32 %v186, %v218
        %v225 = vmul.f32 %v187, %v219
        %v226 = vmul.f32 %v188, %v218
        %v227 = vmul.f32 %v189, %v219
        %v228 = vld [vmem:[%s1] sm:$0xff]
        %v229 = vld [vmem:[%s1 + $0x8] sm:$0xff]
        %v230 = vld [vmem:[%s1 + $0x10] sm:$0xff]
        %v231 = vld [vmem:[%s1 + $0x18] sm:$0xff]
        %233 = vset.pattern.permute.xlu0 0
        %234 = vperm.xlu0 %233, %v228
        %v235 = vpop.permute.xlu0 %234
        %238 = vset.pattern.permute.xlu0 0
        %239 = vperm.xlu0 %238, %v229
        %v240 = vpop.permute.xlu0 %239
        %243 = vset.pattern.permute.xlu0 0
        %244 = vperm.xlu0 %243, %v230
        %v245 = vpop.permute.xlu0 %244
        %248 = vset.pattern.permute.xlu0 0
        %249 = vperm.xlu0 %248, %v231
        %v250 = vpop.permute.xlu0 %249
        %v252 = vmul.f32 %v220, %v235
        %v253 = vmul.f32 %v221, %v235
        %v254 = vmul.f32 %v222, %v240
        %v255 = vmul.f32 %v223, %v240
        %v256 = vmul.f32 %v224, %v245
        %v257 = vmul.f32 %v225, %v245
        %v258 = vmul.f32 %v226, %v250
        %v259 = vmul.f32 %v227, %v250
        %260 = vst [vmem:[%s179] sm:$0xff] %v252
        %261 = vst [vmem:[%s179 + $0x8] sm:$0xff] %v253
        %262 = vst [vmem:[%s179 + $0x10] sm:$0xff] %v254
        %263 = vst [vmem:[%s179 + $0x18] sm:$0xff] %v255
        %264 = vst [vmem:[%s179 + $0x20] sm:$0xff] %v256
        %265 = vst [vmem:[%s179 + $0x28] sm:$0xff] %v257
        %266 = vst [vmem:[%s179 + $0x30] sm:$0xff] %v258
        %267 = vst [vmem:[%s179 + $0x38] sm:$0xff] %v259
        %s268 = sand.u32 %s90, 1
        %s269 = scalar_lea.sflag [#allocation4], %s268
        %s270 = sand.u32 %s90, 1
        %s271 = smul.addr %s270, 64
        %s272 = scalar_lea.vmem [#allocation5], %s271
        // Predicated region
        $region33: #{tpu_custom_call.1} parent=27 // pred_check
          %p273 = pneg %p100
        $region34: #{tpu_custom_call.1} parent=27 // pred_check_branch
          %275 = sbr.rel (%p273) target = $region36
        $region35: #{tpu_custom_call.1} parent=27 // pred_region
          %s276 = smul.u32 2, %s24
          %s278 = ssub.s32 1024, 1024
          %279 = vsyncadd %s269, %s278
          %s280 = smul.addr %s23, 8
          %s281 = sadd.s32 %s276, %s280
          %s282 = smul.addr %s281, 128
          %s283 = scalar_lea.hbm %s2, %s282
          %s284 = sshll.u32 %s272, 4
          %s285 = int_to_ptr.vmem [resolvable:$true] %s284
          %290 = dma.vmem_to_hbm [thread:$0]  %s285, 1024, %s283, %s269, 256, 256, 16
        $region36: #{tpu_custom_call.1} parent=27 // pred_fallthru
          _
      $region28: #{tpu_custom_call.1} parent=5 // pred_fallthru
        _
      %p291 = scmp.le.s32.totalorder 2, %s14
      // Predicated region
      $region37: #{tpu_custom_call.1} parent=5 // pred_check
        %p292 = pneg %p291
      $region38: #{tpu_custom_call.1} parent=5 // pred_check_branch
        %294 = sbr.rel (%p292) target = $region40
      $region39: #{tpu_custom_call.1} parent=5 // pred_region
        %s295 = ssub.s32 %s14, 2
        // Predicated region
        $region41: #{tpu_custom_call.1} parent=39 // pred_check
          %p296 = pneg %p106
        $region42: #{tpu_custom_call.1} parent=39 // pred_check_branch
          %298 = sbr.rel (%p296) target = $region44
        $region43: #{tpu_custom_call.1} parent=39 // pred_region
          %s299 = sand.u32 %s91, 1
          %s300 = scalar_lea.sflag [#allocation4], %s299
          %s301 = sand.u32 %s91, 1
          %s302 = smul.addr %s301, 64
          %s303 = scalar_lea.vmem [#allocation5], %s302
          %304 = dma.done %s300, 1024
        $region44: #{tpu_custom_call.1} parent=39 // pred_fallthru
          _
      $region40: #{tpu_custom_call.1} parent=5 // pred_fallthru
        _
    $region6: #{tpu_custom_call.1} parent=1 // loop_footer
      %s18 = sadd.s32 1, %s14
    $region7: #{tpu_custom_call.1} parent=1 // loop_footer_branch
      %13 = sbr.rel target = $region3
    $region8: #{tpu_custom_call.1} parent=1 // loop_exit
      _
    %305 = vsyncpa [#allocation3], 1
    %s306 = scalar_lea.sflag [#allocation3], 1
    %307 = vsyncpa %s306, 1
    %308 = vsyncpa [#allocation4], 1
    %s309 = scalar_lea.sflag [#allocation4], 1
    %310 = vsyncpa %s309, 1

</llo_original>
